<compile_context>
chip_gen: v6e
topology: v6e:2x2x1
jax: 0.10.0
libtpu: 0.0.40
codegen_flags: <defaults>
</compile_context>

<pallas_src>
import functools
import math

import jax
import jax.numpy as jnp
from jax.experimental import pallas as pl
from jax.experimental.pallas import tpu as pltpu


# --------------------------------------------------------------------------- tiling helpers
def _row_tile(m, cap=512):
    """Row tile for streaming kernels: big enough to amortize ~0.35us/step, small enough to
    keep >=2 grid steps (pipelining / megacore) while double-buffered blocks stay in VMEM."""
    if m <= 64:
        return m                    # single block; nothing to pipeline at this size
    if m > 2 * cap:
        return cap
    half = (((m + 1) // 2) + 7) // 8 * 8
    return min(half, cap)


def _attn_q_tile(n, nk, c, heads, in_itemsize, with_scores, budget_bytes=6 << 20):
    """q-row tile: double-buffered q/kv/out (+ optional f32 scores) blocks plus in-kernel f32
    temporaries must stay well inside v5e's 16 MiB scoped-VMEM default (also safe on v7x)."""
    if n <= 128:
        return n

    def vmem_bytes(tn):
        q_blk = tn * c * in_itemsize
        kv_blk = nk * 2 * c * in_itemsize
        o_blk = tn * c * in_itemsize
        sc_blk = heads * tn * nk * 4 if with_scores else 0
        tmp = 3 * tn * nk * 4 + 2 * tn * c * 4          # live f32 s/p + output staging
        return 2 * (q_blk + kv_blk + o_blk + sc_blk) + tmp

    tn = min(512, n)
    while tn > 128 and vmem_bytes(tn) > budget_bytes:
        tn //= 2
    return max(8, (tn // 8) * 8)


def _itemsize(x):
    return jnp.dtype(x.dtype).itemsize


# --------------------------------------------------------------------------- kernels
def _linear_kernel(x_ref, w_ref, b_ref, o_ref, *, mxu_dtype):
    # x: (tm, K), w: (K, N), b: (1, N) -> o: (tm, N); bf16 MXU operands, f32 accumulation.
    x = x_ref[...].astype(mxu_dtype)
    w = w_ref[...].astype(mxu_dtype)
    acc = jnp.dot(x, w, preferred_element_type=jnp.float32)
    o_ref[...] = (acc + b_ref[...].astype(jnp.float32)).astype(o_ref.dtype)


def _layernorm_kernel(x_ref, g_ref, b_ref, o_ref):
    x = x_ref[...].astype(jnp.float32)
    mean = jnp.mean(x, axis=-1, keepdims=True)
    var = jnp.mean(jnp.square(x - mean), axis=-1, keepdims=True)
    xn = (x - mean) * jax.lax.rsqrt(var + 1e-5)          # eps matches nn.LayerNorm default
    o_ref[...] = (xn * g_ref[...] + b_ref[...]).astype(o_ref.dtype)


def _attn_kernel(q_ref, kv_ref, *out_refs, scale, heads, with_scores, mxu_dtype):
    # One (batch, q-row tile) per grid step; heads split in-kernel from lane-dense blocks.
    C = q_ref.shape[-1]
    hd = C // heads

    # Fold `scale` into q (f32), then cast MXU operands; softmax math stays f32.
    q = (q_ref[0].astype(jnp.float32) * scale).astype(mxu_dtype)       # (tn, C)
    kv = kv_ref[0].astype(mxu_dtype)                                    # (Nk, 2C)

    if with_scores:
        scores_ref, o_ref = out_refs
    else:
        (o_ref,) = out_refs

    o_parts = []
    for h in range(heads):                                              # static head loop
        q_h = q[:, h * hd:(h + 1) * hd]                                 # (tn, hd)
        k_h = kv[:, h * hd:(h + 1) * hd]                                # (Nk, hd)
        v_h = kv[:, C + h * hd:C + (h + 1) * hd]                        # (Nk, hd)

        # QK^T: contract the last dim of both operands -> no explicit k transpose.
        s = jax.lax.dot_general(q_h, k_h, (((1,), (1,)), ((), ())),
                                preferred_element_type=jnp.float32)     # (tn, Nk) f32
        if with_scores:
            scores_ref[0, h] = s.astype(scores_ref.dtype)

        m = jnp.max(s, axis=-1, keepdims=True)
        p = jnp.exp(s - m)                                              # EUP, f32
        l = jnp.sum(p, axis=-1, keepdims=True)
        o_h = jnp.dot(p.astype(mxu_dtype), v_h,
                      preferred_element_type=jnp.float32)               # (tn, hd) f32
        o_parts.append(o_h * pl.reciprocal(l))                          # exact reciprocal

    # Merge heads in-kernel -> single lane-dense (tn, C) store.
    o_ref[0] = jnp.concatenate(o_parts, axis=-1).astype(o_ref.dtype)


# --------------------------------------------------------------------------- wrappers
def pallas_linear(x, w, b, *, tm=None, mxu_dtype=jnp.bfloat16):
    """x: (M, K), w: (K, N), b: (N,) -> (M, N).  Row-tiled, parallel grid."""
    M, K = x.shape
    N = w.shape[1]
    tm = _row_tile(M) if tm is None else tm
    grid = (pl.cdiv(M, tm),)
    w_in = w.astype(mxu_dtype)                          # halve weight DMA when bf16
    b_in = b.reshape(1, N).astype(jnp.float32)
    kernel = functools.partial(_linear_kernel, mxu_dtype=mxu_dtype)
    bytes_accessed = (M * K + M * N) * _itemsize(x) + K * N * _itemsize(w_in) + N * 4
    return pl.pallas_call(
        kernel,
        out_shape=jax.ShapeDtypeStruct((M, N), x.dtype),
        grid=grid,
        in_specs=[pl.BlockSpec((tm, K), lambda i: (i, 0)),
                  pl.BlockSpec((K, N), lambda i: (0, 0)),
                  pl.BlockSpec((1, N), lambda i: (0, 0))],
        out_specs=pl.BlockSpec((tm, N), lambda i: (i, 0)),
        compiler_params=pltpu.CompilerParams(dimension_semantics=("parallel",)),
        cost_estimate=pl.CostEstimate(flops=2 * M * K * N, transcendentals=0,
                                      bytes_accessed=int(bytes_accessed)),
    )(x, w_in, b_in)


def pallas_layernorm(x, gamma, beta, *, tm=None):
    """x: (M, C) -> (M, C), normalize over last dim.  Row-tiled, parallel grid."""
    M, C = x.shape
    tm = _row_tile(M) if tm is None else tm
    grid = (pl.cdiv(M, tm),)
    return pl.pallas_call(
        _layernorm_kernel,
        out_shape=jax.ShapeDtypeStruct((M, C), x.dtype),
        grid=grid,
        in_specs=[pl.BlockSpec((tm, C), lambda i: (i, 0)),
                  pl.BlockSpec((1, C), lambda i: (0, 0)),
                  pl.BlockSpec((1, C), lambda i: (0, 0))],
        out_specs=pl.BlockSpec((tm, C), lambda i: (i, 0)),
        compiler_params=pltpu.CompilerParams(dimension_semantics=("parallel",)),
        cost_estimate=pl.CostEstimate(flops=6 * M * C, transcendentals=M,
                                      bytes_accessed=int(2 * M * C * _itemsize(x))),
    )(x, gamma.reshape(1, C), beta.reshape(1, C))


def pallas_attention_core(q, kv, num_heads, scale, *, with_scores=False,
                          mxu_dtype=jnp.bfloat16):
    """q: (B, N, C) lane-dense; kv: (B, Nk, 2C) lane-dense (k = kv[..., :C], v = kv[..., C:]).
       Returns (scores (B, H, N, Nk) f32 or None, out (B, N, C))."""
    B, N, C = q.shape
    Nk = kv.shape[1]
    hd = C // num_heads
    tn = _attn_q_tile(N, Nk, C, num_heads, _itemsize(q), with_scores)
    grid = (B, pl.cdiv(N, tn))
    kernel = functools.partial(_attn_kernel, scale=scale, heads=num_heads,
                               with_scores=with_scores, mxu_dtype=mxu_dtype)

    out_shapes, out_specs = [], []
    if with_scores:
        out_shapes.append(jax.ShapeDtypeStruct((B, num_heads, N, Nk), jnp.float32))
        out_specs.append(pl.BlockSpec((1, num_heads, tn, Nk), lambda b, i: (b, 0, i, 0)))
    out_shapes.append(jax.ShapeDtypeStruct((B, N, C), q.dtype))
    out_specs.append(pl.BlockSpec((1, tn, C), lambda b, i: (b, i, 0)))

    flops = 4 * B * num_heads * N * Nk * hd
    bytes_accessed = ((q.size + kv.size + B * N * C) * _itemsize(q)
                      + (B * num_heads * N * Nk * 4 if with_scores else 0))
    outs = pl.pallas_call(
        kernel,
        out_shape=tuple(out_shapes),
        grid=grid,
        in_specs=[pl.BlockSpec((1, tn, C), lambda b, i: (b, i, 0)),
                  pl.BlockSpec((1, Nk, 2 * C), lambda b, i: (b, 0, 0))],
        out_specs=tuple(out_specs),
        # Batch axis "parallel": a v7x megacore split lands on B, so each core's K/V block
        # stays resident across its q-tiles (q-tile axis marked "arbitrary").
        compiler_params=pltpu.CompilerParams(
            dimension_semantics=("parallel", "arbitrary")),
        cost_estimate=pl.CostEstimate(flops=int(flops),
                                      transcendentals=int(B * num_heads * N * Nk),
                                      bytes_accessed=int(bytes_accessed)),
    )(q, kv)
    if with_scores:
        return outs[0], outs[1]
    return None, outs[0]


# --------------------------------------------------------------------------- module
def init_attention_params(key, dim, num_heads, sr_ratio):
    ks = jax.random.split(key, 6)
    tn = lambda k, shape: 0.02 * jax.random.truncated_normal(k, -2.0, 2.0, shape, jnp.float32)
    params = {
        # weights stored as (in, out) so x @ W is the Linear forward; qkv_bias=False -> zeros
        "q_w": tn(ks[0], (dim, dim)),          "q_b": jnp.zeros((dim,), jnp.float32),
        "kv_w": tn(ks[1], (dim, 2 * dim)),     "kv_b": jnp.zeros((2 * dim,), jnp.float32),
        "proj_w": tn(ks[2], (dim, dim)),       "proj_b": jnp.zeros((dim,), jnp.float32),
    }
    if sr_ratio > 1:
        fan_out = sr_ratio * sr_ratio * dim
        params["sr_w"] = math.sqrt(2.0 / fan_out) * jax.random.normal(
            ks[3], (dim, dim, sr_ratio, sr_ratio), jnp.float32)       # (outC, inC, kH, kW)
        params["sr_b"] = jnp.zeros((dim,), jnp.float32)
        params["norm_g"] = jnp.ones((dim,), jnp.float32)
        params["norm_b"] = jnp.zeros((dim,), jnp.float32)
    return params


def segformer_attention(x, H, W, params, *, num_heads, sr_ratio, qk_scale=None,
                        with_scores=True, mxu_dtype=jnp.bfloat16):
    """x: (B, N, C) with N == H*W.
       Returns (out (B,N,C), attn_before_softmax (B,heads,N,Nk) or None)."""
    B, N, C = x.shape
    hd = C // num_heads
    scale = qk_scale if qk_scale is not None else hd ** (-0.5)

    # ---- q projection (kept lane-dense as (B, N, C); heads are split inside the kernel)
    q = pallas_linear(x.reshape(B * N, C), params["q_w"], params["q_b"],
                      mxu_dtype=mxu_dtype).reshape(B, N, C)

    # ---- optional spatial reduction (conv k=s=sr_ratio lowered to matmul) + layernorm
    if sr_ratio > 1:
        s = sr_ratio
        Hs, Ws = H // s, W // s
        x_img = x.transpose(0, 2, 1).reshape(B, C, H, W)                 # NCHW, as in torch
        patches = (x_img.reshape(B, C, Hs, s, Ws, s)
                        .transpose(0, 2, 4, 1, 3, 5)                     # (B,Hs,Ws,C,s,s)
                        .reshape(B * Hs * Ws, C * s * s))
        w_flat = params["sr_w"].reshape(C, C * s * s).T                  # (C*s*s, C)
        xk = pallas_linear(patches, w_flat, params["sr_b"], mxu_dtype=mxu_dtype)
        xk = pallas_layernorm(xk, params["norm_g"], params["norm_b"])
        Nk = Hs * Ws
    else:
        xk = x.reshape(B * N, C)
        Nk = N

    # ---- kv projection; kept packed lane-dense as (B, Nk, 2C) — no head-split transposes
    kv = pallas_linear(xk, params["kv_w"], params["kv_b"],
                       mxu_dtype=mxu_dtype).reshape(B, Nk, 2 * C)

    # ---- fused attention core; output comes back head-merged as (B, N, C)
    scores, o = pallas_attention_core(q, kv, num_heads, scale,
                                      with_scores=with_scores, mxu_dtype=mxu_dtype)

    # ---- output projection (no transpose needed: o is already (B, N, C))
    out = pallas_linear(o.reshape(B * N, C), params["proj_w"], params["proj_b"],
                        mxu_dtype=mxu_dtype).reshape(B, N, C)
    return out, scores


# --------------------------------------------------------------------------- reference (pure JAX)
def _reference(x, H, W, params, *, num_heads, sr_ratio):
    B, N, C = x.shape
    hd = C // num_heads
    scale = hd ** (-0.5)
    q = (x.reshape(B * N, C) @ params["q_w"]).reshape(B, N, num_heads, hd).transpose(0, 2, 1, 3)
    if sr_ratio > 1:
        s = sr_ratio
        Hs, Ws = H // s, W // s
        x_img = x.transpose(0, 2, 1).reshape(B, C, H, W)
        patches = (x_img.reshape(B, C, Hs, s, Ws, s).transpose(0, 2, 4, 1, 3, 5)
                   .reshape(B * Hs * Ws, C * s * s))
        xk = patches @ params["sr_w"].reshape(C, C * s * s).T + params["sr_b"]
        mu = xk.mean(-1, keepdims=True)
        var = ((xk - mu) ** 2).mean(-1, keepdims=True)
        xk = (xk - mu) / jnp.sqrt(var + 1e-5) * params["norm_g"] + params["norm_b"]
        Nk = Hs * Ws
    else:
        xk, Nk = x.reshape(B * N, C), N
    kv = (xk @ params["kv_w"]).reshape(B, Nk, 2, num_heads, hd).transpose(2, 0, 3, 1, 4)
    k, v = kv[0], kv[1]
    attn = jnp.einsum("bhnd,bhmd->bhnm", q, k) * scale
    p = jax.nn.softmax(attn, axis=-1)
    o = jnp.einsum("bhnm,bhmd->bhnd", p, v).transpose(0, 2, 1, 3).reshape(B, N, C)
    out = o @ params["proj_w"] + params["proj_b"]
    return out, attn


# --------------------------------------------------------------------------- main
if __name__ == "__main__":
    B, dim, num_heads, sr_ratio = 2, 32, 8, 2
    H = W = 8
    N = H * W

    key = jax.random.PRNGKey(0)
    k_params, k_x = jax.random.split(key)
    params = init_attention_params(k_params, dim, num_heads, sr_ratio)
    x = jax.random.normal(k_x, (B, N, dim), jnp.float32)

    out, attn_before_softmax = segformer_attention(
        x, H, W, params, num_heads=num_heads, sr_ratio=sr_ratio)
    jax.block_until_ready((out, attn_before_softmax))

    ref_out, ref_attn = _reference(x, H, W, params, num_heads=num_heads, sr_ratio=sr_ratio)
    Nk = (H // sr_ratio) * (W // sr_ratio)
    assert out.shape == (B, N, dim)
    assert attn_before_softmax.shape == (B, num_heads, N, Nk)
    # Tolerances sized for bf16 MXU operands (f32 accumulation); softmax math is f32.
    err_attn = float(jnp.max(jnp.abs(attn_before_softmax - ref_attn)))
    err_out = float(jnp.max(jnp.abs(out - ref_out)))
    assert jnp.allclose(attn_before_softmax, ref_attn, atol=5e-3, rtol=5e-3), err_attn
    assert jnp.allclose(out, ref_out, atol=5e-3, rtol=5e-3), err_out

    print("KERNEL_OK")
</pallas_src>

<mosaic_0001>
module attributes {stable_mosaic.version = 11 : i64} {
  func.func @_linear_kernel(%arg0: i32, %arg1: memref<64x32xf32, #tpu.memory_space<vmem>>, %arg2: memref<32x32xbf16, #tpu.memory_space<vmem>>, %arg3: memref<1x32xf32, #tpu.memory_space<vmem>>, %arg4: memref<64x32xf32, #tpu.memory_space<vmem>>) attributes {dimension_semantics = [#tpu.dimension_semantics<parallel>], iteration_bounds = array<i64: 2>, scalar_prefetch = 0 : i64, scratch_operands = 0 : i64, tpu.core_type = #tpu.core_type<tc>, window_params = [{transform_indices = @transform_0, window_bounds = array<i64: 64, 32>}, {pipeline_mode = #tpu.pipeline_mode<synchronous>, transform_indices = @transform_1, window_bounds = array<i64: 32, 32>}, {pipeline_mode = #tpu.pipeline_mode<synchronous>, transform_indices = @transform_2, window_bounds = array<i64: 1, 32>}, {transform_indices = @transform_3, window_bounds = array<i64: 64, 32>}]} {
    %c0 = arith.constant 0 : index
    %c0_0 = arith.constant 0 : index
    %0 = vector.load %arg1[%c0, %c0_0] : memref<64x32xf32, #tpu.memory_space<vmem>>, vector<64x32xf32>
    %1 = arith.truncf %0 : vector<64x32xf32> to vector<64x32xbf16>
    %c0_1 = arith.constant 0 : index
    %c0_2 = arith.constant 0 : index
    %2 = vector.load %arg2[%c0_1, %c0_2] : memref<32x32xbf16, #tpu.memory_space<vmem>>, vector<32x32xbf16>
    %cst = arith.constant dense<0.000000e+00> : vector<64x32xf32>
    %3 = tpu.matmul %1, %2, %cst {dimension_numbers = #tpu.dot_dimension_numbers<[1], [0], [0], [1], [0, 0, 1, 1], [], []>} : vector<64x32xbf16>, vector<32x32xbf16>, vector<64x32xf32> -> vector<64x32xf32>
    %c0_3 = arith.constant 0 : index
    %c0_4 = arith.constant 0 : index
    %4 = vector.load %arg3[%c0_3, %c0_4] : memref<1x32xf32, #tpu.memory_space<vmem>>, vector<1x32xf32>
    %5 = vector.broadcast %4 : vector<1x32xf32> to vector<64x32xf32>
    %6 = arith.addf %3, %5 : vector<64x32xf32>
    %c0_5 = arith.constant 0 : index
    %c0_6 = arith.constant 0 : index
    %7 = vector.load %arg4[%c0_5, %c0_6] : memref<64x32xf32, #tpu.memory_space<vmem>>, vector<64x32xf32>
    tpu.vector_store %arg4[%c0_5, %c0_6], %6 {strides = array<i32>} : memref<64x32xf32, #tpu.memory_space<vmem>>, vector<64x32xf32>,
    return
  }
  func.func @transform_0(%arg0: i32) -> (i32, i32) {
    %c0_i32 = arith.constant 0 : i32
    %c0_i32_0 = arith.constant 0 : i32
    return %arg0, %c0_i32 : i32, i32
  }
  func.func @transform_1(%arg0: i32) -> (i32, i32) {
    %c0_i32 = arith.constant 0 : i32
    %c0_i32_0 = arith.constant 0 : i32
    %c0_i32_1 = arith.constant 0 : i32
    return %c0_i32, %c0_i32_0 : i32, i32
  }
  func.func @transform_2(%arg0: i32) -> (i32, i32) {
    %c0_i32 = arith.constant 0 : i32
    %c0_i32_0 = arith.constant 0 : i32
    %c0_i32_1 = arith.constant 0 : i32
    return %c0_i32, %c0_i32_0 : i32, i32
  }
  func.func @transform_3(%arg0: i32) -> (i32, i32) {
    %c0_i32 = arith.constant 0 : i32
    %c0_i32_0 = arith.constant 0 : i32
    return %arg0, %c0_i32 : i32, i32
  }
}

</mosaic_0001>

<llo_original>
// kernel: tpu_custom_call.1
$region0: #{tpu_custom_call.1}
  #allocation0 [shape = 'u32[]', space=smem, size = 0x4, offset = 0x4, fixed_abs, tag = 'smem constant byte address 0x4 - core index']
  #allocation1 [shape = 'u32[144,128]{1,0:T(1,128)}', space=vmem, size = 0x12000, scoped, tag = 'internal scratch']
  %s0 = inlined_call_operand.vmem [shape: f32[128,32], index: 0, kind: input, shape index: {}]
  %s1 = inlined_call_operand.vmem [shape: bf16[32,32], index: 1, kind: input, shape index: {}]
  %s2 = inlined_call_operand.vmem [shape: f32[1,32], index: 2, kind: input, shape index: {}]
  %s3 = inlined_call_operand.vmem [shape: f32[128,32], index: 3, kind: output, shape index: {}]
  %s4 = sld [smem:[#allocation0]]
  $region45: #{tpu_custom_call.1} parent=0
    _
  %s6 = ssub.s32 1, %s4
  %s7 = scalar_select 0, %s6, %s4
  loop: start=0, step=1, limit=4
  $region2: #{tpu_custom_call.1} parent=0 // loop_pre_header
    _
  $region3: #{tpu_custom_call.1} parent=0 // loop_header
    %s9 = sphi 0, %s13
    %p10 = scmp.ge.s32.totalorder %s9, 4
    %s19 = sphi 0, %s21
    %s22 = sphi 0, %s19
    %s23 = sphi 0, %s22
    %s39 = sphi 0, %s23
    %s43 = sphi 0, %s43
    %s45 = sphi 0, %s43
    %s46 = sphi 0, %s45
    %s60 = sphi 0, %s46
    %s64 = sphi 0, %s64
    %s66 = sphi 0, %s64
    %s67 = sphi 0, %s66
    %s81 = sphi 0, %s67
    %s87 = sphi 0, %s89
    %s90 = sphi 0, %s87
    %s91 = sphi 0, %s90
    %s107 = sphi 0, %s91
  $region4: #{tpu_custom_call.1} parent=0 // loop_header_branch
    %12 = sbr.rel (%p10) target = $region8
  $region5: #{tpu_custom_call.1} parent=0 // loop_body
    %s14 = ssub.s32 %s9, 1
    %s15 = ssub.s32 %s9, 2
    %s16 = sadd.s32 %s9, 1
    %s17 = ssub.s32 %s9, %s16
    %p18 = scmp.eq.s32.totalorder %s17, 0
    %s20 = sadd.s32 %s19, 1
    %s21 = scalar_select %p18, %s19, %s20
    %p24 = pneg %p18
    %p25 = scmp.eq.s32.totalorder %s9, 1
    %p26 = por %p24, %p25
    %p27 = scmp.ne.s32.totalorder %s19, %s22
    %p28 = scmp.eq.s32.totalorder %s9, 0
    %p29 = por %p27, %p28
    %p30 = scmp.ne.s32.totalorder %s19, %s22
    %p31 = scmp.eq.s32.totalorder %s14, 1
    %p32 = por %p30, %p31
    %p33 = scmp.ne.s32.totalorder %s22, %s23
    %p34 = scmp.eq.s32.totalorder %s14, 0
    %p35 = por %p33, %p34
    %p36 = scmp.ne.s32.totalorder %s22, %s23
    %p37 = scmp.eq.s32.totalorder %s15, 1
    %p38 = por %p36, %p37
    %p40 = scmp.ne.s32.totalorder %s23, %s39
    %p41 = scmp.eq.s32.totalorder %s15, 0
    %p42 = por %p40, %p41
    %s44 = sadd.s32 %s43, 1
    %p47 = scmp.eq.s32.totalorder %s9, 1
    %p48 = scmp.ne.s32.totalorder %s43, %s45
    %p49 = scmp.eq.s32.totalorder %s9, 0
    %p50 = por %p48, %p49
    %p51 = scmp.ne.s32.totalorder %s43, %s45
    %p52 = scmp.eq.s32.totalorder %s14, 1
    %p53 = por %p51, %p52
    %p54 = scmp.ne.s32.totalorder %s45, %s46
    %p55 = scmp.eq.s32.totalorder %s14, 0
    %p56 = por %p54, %p55
    %p57 = scmp.ne.s32.totalorder %s45, %s46
    %p58 = scmp.eq.s32.totalorder %s15, 1
    %p59 = por %p57, %p58
    %p61 = scmp.ne.s32.totalorder %s46, %s60
    %p62 = scmp.eq.s32.totalorder %s15, 0
    %p63 = por %p61, %p62
    %s65 = sadd.s32 %s64, 1
    %p68 = scmp.eq.s32.totalorder %s9, 1
    %p69 = scmp.ne.s32.totalorder %s64, %s66
    %p70 = scmp.eq.s32.totalorder %s9, 0
    %p71 = por %p69, %p70
    %p72 = scmp.ne.s32.totalorder %s64, %s66
    %p73 = scmp.eq.s32.totalorder %s14, 1
    %p74 = por %p72, %p73
    %p75 = scmp.ne.s32.totalorder %s66, %s67
    %p76 = scmp.eq.s32.totalorder %s14, 0
    %p77 = por %p75, %p76
    %p78 = scmp.ne.s32.totalorder %s66, %s67
    %p79 = scmp.eq.s32.totalorder %s15, 1
    %p80 = por %p78, %p79
    %p82 = scmp.ne.s32.totalorder %s67, %s81
    %p83 = scmp.eq.s32.totalorder %s15, 0
    %p84 = por %p82, %p83
    %s85 = ssub.s32 %s9, %s16
    %p86 = scmp.eq.s32.totalorder %s85, 0
    %s88 = sadd.s32 %s87, 1
    %s89 = scalar_select %p86, %s87, %s88
    %p92 = pneg %p86
    %p93 = scmp.eq.s32.totalorder %s9, 1
    %p94 = por %p92, %p93
    %p95 = scmp.ne.s32.totalorder %s87, %s90
    %p96 = scmp.eq.s32.totalorder %s9, 0
    %p97 = por %p95, %p96
    %p98 = scmp.ne.s32.totalorder %s87, %s90
    %p99 = scmp.eq.s32.totalorder %s14, 1
    %p100 = por %p98, %p99
    %p101 = scmp.ne.s32.totalorder %s90, %s91
    %p102 = scmp.eq.s32.totalorder %s14, 0
    %p103 = por %p101, %p102
    %p104 = scmp.ne.s32.totalorder %s90, %s91
    %p105 = scmp.eq.s32.totalorder %s15, 1
    %p106 = por %p104, %p105
    %p108 = scmp.ne.s32.totalorder %s91, %s107
    %p109 = scmp.eq.s32.totalorder %s15, 0
    %p110 = por %p108, %p109
    %p111 = scmp.le.s32.totalorder 1, %s9
    %p112 = scmp.lt.s32.totalorder %s9, 3
    %p113 = pnand %p111, %p112
    %p114 = pneg %p113
    // Predicated region
    $region9: #{tpu_custom_call.1} parent=5 // pred_check
      _
    $region10: #{tpu_custom_call.1} parent=5 // pred_check_branch
      %116 = sbr.rel (%p113) target = $region12
    $region11: #{tpu_custom_call.1} parent=5 // pred_region
      %s117 = ssub.s32 %s9, 1
      // Predicated region
      $region13: #{tpu_custom_call.1} parent=11 // pred_check
        %p118 = pneg %p56
      $region14: #{tpu_custom_call.1} parent=11 // pred_check_branch
        %120 = sbr.rel (%p118) target = $region16
      $region15: #{tpu_custom_call.1} parent=11 // pred_region
        _
      $region16: #{tpu_custom_call.1} parent=11 // pred_fallthru
        _
      // Predicated region
      $region17: #{tpu_custom_call.1} parent=11 // pred_check
        %p121 = pneg %p77
      $region18: #{tpu_custom_call.1} parent=11 // pred_check_branch
        %123 = sbr.rel (%p121) target = $region20
      $region19: #{tpu_custom_call.1} parent=11 // pred_region
        _
      $region20: #{tpu_custom_call.1} parent=11 // pred_fallthru
        _
    $region12: #{tpu_custom_call.1} parent=5 // pred_fallthru
      _
    %p124 = scmp.lt.s32.totalorder %s9, 2
    // Predicated region
    $region21: #{tpu_custom_call.1} parent=5 // pred_check
      %p125 = pneg %p124
    $region22: #{tpu_custom_call.1} parent=5 // pred_check_branch
      %127 = sbr.rel (%p125) target = $region24
    $region23: #{tpu_custom_call.1} parent=5 // pred_region
      // Predicated region
      $region25: #{tpu_custom_call.1} parent=23 // pred_check
        %p128 = pneg %p29
      $region26: #{tpu_custom_call.1} parent=23 // pred_check_branch
        %130 = sbr.rel (%p128) target = $region28
      $region27: #{tpu_custom_call.1} parent=23 // pred_region
        %s131 = smul.u32 8, %s9
        %p132 = scmp.lt.s32.totalorder %s131, 15
        %s133 = scalar_select %p132, %s131, 15
        %s134 = smul.addr %s133, 8
        %s135 = scalar_lea.vmem %s0, %s134
        %s136 = smul.u32 8, %s9
      $region28: #{tpu_custom_call.1} parent=23 // pred_fallthru
        _
    $region24: #{tpu_custom_call.1} parent=5 // pred_fallthru
      _
    %p137 = scmp.le.s32.totalorder 1, %s9
    %p138 = scmp.lt.s32.totalorder %s9, 3
    %p139 = pnand %p137, %p138
    %p140 = pneg %p139
    // Predicated region
    $region29: #{tpu_custom_call.1} parent=5 // pred_check
      _
    $region30: #{tpu_custom_call.1} parent=5 // pred_check_branch
      %142 = sbr.rel (%p139) target = $region32
    $region31: #{tpu_custom_call.1} parent=5 // pred_region
      %s143 = ssub.s32 %s9, 1
      %s144 = smul.u32 8, %s14
      %p145 = scmp.lt.s32.totalorder %s144, 15
      %s146 = scalar_select %p145, %s144, 15
      %s147 = smul.addr %s146, 8
      %s148 = scalar_lea.vmem %s0, %s147
      %p149 = pneg %p35
      %p150 = pneg %p32
      %p151 = pneg %p56
      %p152 = pneg %p53
      %p153 = pneg %p77
      %p154 = pneg %p74
      %p155 = pneg %p103
      %p156 = pneg %p100
      %s157 = smul.u32 8, %s14
      %p158 = scmp.lt.s32.totalorder %s157, 15
      %s159 = scalar_select %p158, %s157, 15
      %s160 = smul.addr %s159, 8
      %s161 = scalar_lea.vmem %s3, %s160
      %s162 = smul.u32 8, %s14
      %p163 = scmp.lt.s32.totalorder %s162, 15
      %s164 = scalar_select %p163, %s162, 15
      %s165 = smul.addr %s164, 8
      %s166 = scalar_lea.vmem %s0, %s165
      %s167 = smul.u32 8, %s14
      %s168 = smul.u32 8, %s14
      %p169 = scmp.lt.s32.totalorder %s168, 15
      %s170 = scalar_select %p169, %s168, 15
      %s171 = smul.addr %s170, 8
      %s172 = scalar_lea.vmem %s3, %s171
      %s173 = smul.u32 8, %s14
      %v175 = vld [vmem:[%s166] sm:$0xff]
      %v176 = vld [vmem:[%s166 + $0x8] sm:$0xff]
      %v177 = vld [vmem:[%s166 + $0x10] sm:$0xff]
      %v178 = vld [vmem:[%s166 + $0x18] sm:$0xff]
      %v179 = vld [vmem:[%s166 + $0x20] sm:$0xff]
      %v180 = vld [vmem:[%s166 + $0x28] sm:$0xff]
      %v181 = vld [vmem:[%s166 + $0x30] sm:$0xff]
      %v182 = vld [vmem:[%s166 + $0x38] sm:$0xff]
      %v183 = vpack.c.bf16 %v176, %v175
      %v184 = vpack.c.bf16 %v178, %v177
      %v185 = vpack.c.bf16 %v180, %v179
      %v186 = vpack.c.bf16 %v182, %v181
      %v187 = vld [vmem:[%s1] sm:$0xf]
      %v188 = vld [vmem:[%s1 + $0x4] sm:$0xf]
      %v189 = vld [vmem:[%s1 + $0x8] sm:$0xf]
      %v190 = vld [vmem:[%s1 + $0xc] sm:$0xf]
      %v191 = vld [vmem:[%s2] sm:$0x1]
      %v193 = vlaneseq
      %v194 = vshrl.u32 %v193, 7
      %v195 = vsub.s32 0, %v194
      %v196 = vrot.slane %v191, %v195
      %v202 = vunpack.c.l.b16 %v187
      %v203 = vunpack.c.l.b16 %v188
      %v204 = vunpack.c.l.b16 %v189
      %v205 = vunpack.c.l.b16 %v190
      %v206 = vpack.c.b16 %v203, %v202
      %v207 = vpack.c.b16 %v205, %v204
      %vm210 = vcmask 261120
      %v212 = vsel %vm210, %v183, 0
      %v215 = vsel %vm210, %v184, 0
      %v218 = vsel %vm210, %v185, 0
      %v221 = vsel %vm210, %v186, 0
      %223 = vmatprep.subr.bf16.mxu0 0
      %224 = vmatpush1.bf16.msra.mxu0 0
      %225 = vmatprep.subr.bf16.mxu0 0
      %226 = vmatpush1.bf16.msra.mxu0 0
      %227 = vmatprep.subr.bf16.mxu0 0
      %228 = vmatpush1.bf16.msra.mxu0 0
      %229 = vmatprep.subr.bf16.mxu0 0
      %230 = vmatpush1.bf16.msra.mxu0 0
      %231 = vmatprep.subr.bf16.mxu0 0
      %232 = vmatpush1.bf16.msra.mxu0 0
      %233 = vmatprep.subr.bf16.mxu0 0
      %234 = vmatpush1.bf16.msra.mxu0 0
      %235 = vmatprep.subr.bf16.mxu0 0
      %236 = vmatpush1.bf16.msra.mxu0 %v207
      %237 = vmatprep.subr.bf16.mxu0 0
      %238 = vmatpush1.bf16.msra.mxu0 %v206
      %239 = vmatprep.subr.bf16.mxu0 0
      %240 = vmatpush2.bf16.msra.mxu0 0
      %241 = vmatprep.subr.bf16.mxu0 0
      %242 = vmatpush2.bf16.msra.mxu0 0
      %243 = vmatprep.subr.bf16.mxu0 0
      %244 = vmatpush2.bf16.msra.mxu0 0
      %245 = vmatprep.subr.bf16.mxu0 0
      %246 = vmatpush2.bf16.msra.mxu0 0
      %247 = vmatprep.subr.bf16.mxu0 0
      %248 = vmatpush2.bf16.msra.mxu0 0
      %249 = vmatprep.subr.bf16.mxu0 0
      %250 = vmatpush2.bf16.msra.mxu0 0
      %251 = vmatprep.subr.bf16.mxu0 0
      %252 = vmatpush2.bf16.msra.mxu0 0
      %253 = vmatprep.subr.bf16.mxu0 0
      %254 = vmatpush2.bf16.msra.mxu0 0
      %255 = vmatprep.mubr.bf16.mxu0 0
      %256 = vmatmul.mubr.bf16.gmra.mxu0 %v212
      %v257 = vpop.f32.mrf.mxu0
      %v258 = vadd.f32 %v196, %v257
      %v259 = vpop.f32.mrf.mxu0
      %v260 = vpop.f32.mrf.mxu0
      %v261 = vadd.f32 %v196, %v260
      %v262 = vpop.f32.mrf.mxu0
      %263 = vmatprep.mubr.bf16.mxu0 0
      %264 = vmatmul.mubr.bf16.gmra.mxu0 %v215
      %v265 = vpop.f32.mrf.mxu0
      %v266 = vadd.f32 %v196, %v265
      %v267 = vpop.f32.mrf.mxu0
      %v268 = vpop.f32.mrf.mxu0
      %v269 = vadd.f32 %v196, %v268
      %v270 = vpop.f32.mrf.mxu0
      %271 = vmatprep.mubr.bf16.mxu0 0
      %272 = vmatmul.mubr.bf16.gmra.mxu0 %v218
      %v273 = vpop.f32.mrf.mxu0
      %v274 = vadd.f32 %v196, %v273
      %v275 = vpop.f32.mrf.mxu0
      %v276 = vpop.f32.mrf.mxu0
      %v277 = vadd.f32 %v196, %v276
      %v278 = vpop.f32.mrf.mxu0
      %279 = vmatprep.mubr.bf16.mxu0 0
      %280 = vmatmul.mubr.bf16.gmra.mxu0 %v221
      %v281 = vpop.f32.mrf.mxu0
      %v282 = vadd.f32 %v196, %v281
      %v283 = vpop.f32.mrf.mxu0
      %v284 = vpop.f32.mrf.mxu0
      %v285 = vadd.f32 %v196, %v284
      %v286 = vpop.f32.mrf.mxu0
      %287 = vdwg.mxu0
      %288 = vst.msk [vmem:[%s172] sm:$0xff] %vm210, %v258
      %289 = vst.msk [vmem:[%s172 + $0x8] sm:$0xff] %vm210, %v261
      %290 = vst.msk [vmem:[%s172 + $0x10] sm:$0xff] %vm210, %v266
      %291 = vst.msk [vmem:[%s172 + $0x18] sm:$0xff] %vm210, %v269
      %292 = vst.msk [vmem:[%s172 + $0x20] sm:$0xff] %vm210, %v274
      %293 = vst.msk [vmem:[%s172 + $0x28] sm:$0xff] %vm210, %v277
      %294 = vst.msk [vmem:[%s172 + $0x30] sm:$0xff] %vm210, %v282
      %295 = vst.msk [vmem:[%s172 + $0x38] sm:$0xff] %vm210, %v285
      %s296 = smul.u32 8, %s14
      %p297 = scmp.lt.s32.totalorder %s296, 15
      %s298 = scalar_select %p297, %s296, 15
      %s299 = smul.addr %s298, 8
      %s300 = scalar_lea.vmem %s3, %s299
      // Predicated region
      $region33: #{tpu_custom_call.1} parent=31 // pred_check
        %p301 = pneg %p100
      $region34: #{tpu_custom_call.1} parent=31 // pred_check_branch
        %303 = sbr.rel (%p301) target = $region36
      $region35: #{tpu_custom_call.1} parent=31 // pred_region
        %s304 = smul.u32 8, %s14
      $region36: #{tpu_custom_call.1} parent=31 // pred_fallthru
        _
    $region32: #{tpu_custom_call.1} parent=5 // pred_fallthru
      _
    %p305 = scmp.le.s32.totalorder 2, %s9
    // Predicated region
    $region37: #{tpu_custom_call.1} parent=5 // pred_check
      %p306 = pneg %p305
    $region38: #{tpu_custom_call.1} parent=5 // pred_check_branch
      %308 = sbr.rel (%p306) target = $region40
    $region39: #{tpu_custom_call.1} parent=5 // pred_region
      %s309 = ssub.s32 %s9, 2
      // Predicated region
      $region41: #{tpu_custom_call.1} parent=39 // pred_check
        %p310 = pneg %p106
      $region42: #{tpu_custom_call.1} parent=39 // pred_check_branch
        %312 = sbr.rel (%p310) target = $region44
      $region43: #{tpu_custom_call.1} parent=39 // pred_region
        %s313 = smul.u32 8, %s15
        %p314 = scmp.lt.s32.totalorder %s313, 15
        %s315 = scalar_select %p314, %s313, 15
        %s316 = smul.addr %s315, 8
        %s317 = scalar_lea.vmem %s3, %s316
      $region44: #{tpu_custom_call.1} parent=39 // pred_fallthru
        _
    $region40: #{tpu_custom_call.1} parent=5 // pred_fallthru
      _
  $region6: #{tpu_custom_call.1} parent=0 // loop_footer
    %s13 = sadd.s32 1, %s9
  $region7: #{tpu_custom_call.1} parent=0 // loop_footer_branch
    %8 = sbr.rel target = $region3
  $region8: #{tpu_custom_call.1} parent=0 // loop_exit
    _

</llo_original>
